<compile_context>
chip_gen: v5e
topology: v5e:2x2
jax: 0.10.0
libtpu: 0.0.40
codegen_flags: <defaults>
</compile_context>

<pallas_src>
import jax
import jax.numpy as jnp
from jax.experimental import pallas as pl
from jax.experimental.pallas import tpu as pltpu

_LANE = 128                            # lane-dense last dim (full vreg width)
_TARGET_BLOCK_BYTES = 2 * 1024 * 1024  # ~2 MiB per block buffer


def _h_swish_kernel(x_ref, o_ref):
    x = x_ref[...]
    # hard-sigmoid: relu6(x + 3) / 6, computed in the input dtype (VPU only).
    hs = jnp.clip(x + 3.0, 0.0, 6.0) * (1.0 / 6.0)
    o_ref[...] = (x * hs).astype(o_ref.dtype)


def _pick_block_rows(rows, itemsize):
    """Largest near-balanced block (multiple of 8 sublanes) around ~2 MiB."""
    target_rows = max(8, (_TARGET_BLOCK_BYTES // (_LANE * itemsize)) // 8 * 8)
    if rows <= target_rows:
        return rows                    # single block == full array dims (always legal)
    n_blocks = pl.cdiv(rows, target_rows)
    # Balance block sizes across the grid instead of one full + one sliver,
    # then round up to a multiple of 8 so the (8,128) tiling constraint holds.
    block_rows = pl.cdiv(rows, n_blocks)
    block_rows = ((block_rows + 7) // 8) * 8
    return block_rows


def _h_swish_2d(x2d):
    """Hard-swish over a (rows, 128) lane-dense slab."""
    rows, lane = x2d.shape
    itemsize = jnp.dtype(x2d.dtype).itemsize

    block_rows = _pick_block_rows(rows, itemsize)
    grid = (pl.cdiv(rows, block_rows),)
    nbytes = rows * lane * itemsize

    return pl.pallas_call(
        _h_swish_kernel,
        out_shape=jax.ShapeDtypeStruct((rows, lane), x2d.dtype),
        grid_spec=pltpu.PrefetchScalarGridSpec(
            num_scalar_prefetch=0,
            grid=grid,
            in_specs=[pl.BlockSpec((block_rows, lane), lambda i: (i, 0))],
            out_specs=pl.BlockSpec((block_rows, lane), lambda i: (i, 0)),
        ),
        compiler_params=pltpu.CompilerParams(
            # Independent row blocks; "parallel" lets megacore shard the grid.
            dimension_semantics=("parallel",),
        ),
        cost_estimate=pl.CostEstimate(
            flops=5 * rows * lane,       # add + 2x clamp + 2x mul per element
            transcendentals=0,
            bytes_accessed=2 * nbytes,   # one read + one write of the slab
        ),
    )(x2d)


@jax.jit
def h_swish(x):
    """Elementwise hard-swish; any shape, returns same shape/dtype."""
    orig_shape = x.shape
    n = x.size
    if n == 0:
        return x

    x_flat = jnp.ravel(x)                 # free (layout-preserving) under jit
    n_bulk = (n // _LANE) * _LANE          # 128-aligned bulk (== n in common case)

    parts = []
    if n_bulk > 0:
        bulk = x_flat[:n_bulk].reshape(n_bulk // _LANE, _LANE)
        parts.append(_h_swish_2d(bulk).reshape(-1))
    if n_bulk < n:
        # <128-element tail: plain jnp (cheaper than padding the whole tensor).
        t = x_flat[n_bulk:]
        parts.append((t * jnp.clip(t + 3.0, 0.0, 6.0) * (1.0 / 6.0)).astype(x.dtype))

    out_flat = parts[0] if len(parts) == 1 else jnp.concatenate(parts)
    return out_flat.reshape(orig_shape)


def h_swish_ref(x):
    # Matches PyTorch: x * relu6(x + 3) / 6, in the input dtype.
    return (x * jnp.clip(x + 3.0, 0.0, 6.0) / 6.0).astype(x.dtype)


if __name__ == "__main__":
    key = jax.random.PRNGKey(0)

    # NCHW input consistent with the MobileNet conv-net context.
    x = jax.random.normal(key, (2, 4, 16, 16), dtype=jnp.float32) * 4.0
    y = jax.block_until_ready(h_swish(x))
    assert y.shape == x.shape and y.dtype == x.dtype
    assert jnp.allclose(y, h_swish_ref(x), atol=1e-5, rtol=1e-6)

    # Multi-block path with balanced (non-sliver) blocks (rows = 4225 > 4096).
    x_big = jax.random.normal(jax.random.PRNGKey(1), (65, 65, 128), dtype=jnp.float32)
    y_big = jax.block_until_ready(h_swish(x_big))
    assert jnp.allclose(y_big, h_swish_ref(x_big), atol=1e-5, rtol=1e-6)

    # Non-128-divisible size -> bulk kernel + tiny jnp tail path.
    x_odd = jax.random.normal(jax.random.PRNGKey(2), (3, 5, 7, 11), dtype=jnp.float32)
    y_odd = jax.block_until_ready(h_swish(x_odd))
    assert jnp.allclose(y_odd, h_swish_ref(x_odd), atol=1e-5, rtol=1e-6)

    # bf16 path (computed in-dtype, like PyTorch hardswish).
    x_bf = (jax.random.normal(jax.random.PRNGKey(3), (2, 4, 16, 16)) * 4.0).astype(jnp.bfloat16)
    y_bf = jax.block_until_ready(h_swish(x_bf))
    assert y_bf.dtype == jnp.bfloat16
    assert jnp.allclose(y_bf.astype(jnp.float32),
                        h_swish_ref(x_bf).astype(jnp.float32), atol=3e-2, rtol=3e-2)

    print("KERNEL_OK")
</pallas_src>

<mosaic_0001>
module attributes {stable_mosaic.version = 11 : i64} {
  func.func @_h_swish_kernel(%arg0: i32, %arg1: memref<16x128xf32, #tpu.memory_space<vmem>>, %arg2: memref<16x128xf32, #tpu.memory_space<vmem>>) attributes {dimension_semantics = [#tpu.dimension_semantics<parallel>], iteration_bounds = array<i64: 1>, scalar_prefetch = 0 : i64, scratch_operands = 0 : i64, tpu.core_type = #tpu.core_type<tc>, window_params = [{transform_indices = @transform_0, window_bounds = array<i64: 16, 128>}, {transform_indices = @transform_1, window_bounds = array<i64: 16, 128>}]} {
    %c0 = arith.constant 0 : index
    %c0_0 = arith.constant 0 : index
    %0 = vector.load %arg1[%c0, %c0_0] : memref<16x128xf32, #tpu.memory_space<vmem>>, vector<16x128xf32>
    %cst = arith.constant 3.000000e+00 : f32
    %1 = vector.broadcast %cst : f32 to vector<16x128xf32>
    %2 = arith.addf %0, %1 : vector<16x128xf32>
    %cst_1 = arith.constant 0.000000e+00 : f32
    %cst_2 = arith.constant 6.000000e+00 : f32
    %3 = vector.broadcast %cst_1 : f32 to vector<16x128xf32>
    %4 = arith.maximumf %3, %2 : vector<16x128xf32>
    %5 = vector.broadcast %cst_2 : f32 to vector<16x128xf32>
    %6 = arith.minimumf %5, %4 : vector<16x128xf32>
    %cst_3 = arith.constant 0.166666672 : f32
    %7 = vector.broadcast %cst_3 : f32 to vector<16x128xf32>
    %8 = arith.mulf %6, %7 : vector<16x128xf32>
    %9 = arith.mulf %0, %8 : vector<16x128xf32>
    %c0_4 = arith.constant 0 : index
    %c0_5 = arith.constant 0 : index
    %10 = vector.load %arg2[%c0_4, %c0_5] : memref<16x128xf32, #tpu.memory_space<vmem>>, vector<16x128xf32>
    tpu.vector_store %arg2[%c0_4, %c0_5], %9 {strides = array<i32>} : memref<16x128xf32, #tpu.memory_space<vmem>>, vector<16x128xf32>,
    return
  }
  func.func @transform_0(%arg0: i32) -> (i32, i32) {
    %c0_i32 = arith.constant 0 : i32
    %c0_i32_0 = arith.constant 0 : i32
    return %arg0, %c0_i32 : i32, i32
  }
  func.func @transform_1(%arg0: i32) -> (i32, i32) {
    %c0_i32 = arith.constant 0 : i32
    %c0_i32_0 = arith.constant 0 : i32
    return %arg0, %c0_i32 : i32, i32
  }
}

</mosaic_0001>

<llo_original>
// kernel: h_swish.1
$region0: #{h_swish.1}
  #allocation0 [shape = 'u32[]', space=smem, size = 0x4, offset = 0x4, fixed_abs, tag = 'smem constant byte address 0x4 - core index']
  #allocation1 [shape = 'u32[72,128]{1,0:T(1,128)}', space=vmem, size = 0x9000, scoped, tag = 'internal scratch']
  %s0 = inlined_call_operand.vmem [shape: f32[16,128], index: 0, kind: input, shape index: {}]
  %s1 = inlined_call_operand.vmem [shape: f32[16,128], index: 1, kind: output, shape index: {}]
  %s2 = sld [smem:[#allocation0]]
  $region14: #{h_swish.1} parent=0
    _
  %s4 = ssub.s32 1, %s2
  %s5 = scalar_select 0, %s4, %s2
  // Predicated region
  $region2: #{h_swish.1} parent=0 // pred_check
    _
  $region3: #{h_swish.1} parent=0 // pred_check_branch
    %7 = sbr.rel (0) target = $region5
  $region4: #{h_swish.1} parent=0 // pred_region
    _
  $region5: #{h_swish.1} parent=0 // pred_fallthru
    _
  %v8 = vld [vmem:[%s0] sm:$0xff]
  %v9 = vld [vmem:[%s0 + $0x8] sm:$0xff]
  %v10 = vadd.f32 %v8, 3.0
  %v11 = vadd.f32 %v9, 3.0
  %v12 = vmax.f32 %v10, 0.0
  %v13 = vmax.f32 %v11, 0.0
  %v14 = vmin.f32 %v12, 6.0
  %v15 = vmin.f32 %v13, 6.0
  %v16 = vmul.f32 %v14, 0.16666667
  %v17 = vmul.f32 %v15, 0.16666667
  %v18 = vmul.f32 %v8, %v16
  %v19 = vmul.f32 %v9, %v17
  %20 = vst [vmem:[%s1] sm:$0xff] %v18
  %21 = vst [vmem:[%s1 + $0x8] sm:$0xff] %v19
  // Predicated region
  $region6: #{h_swish.1} parent=0 // pred_check
    _
  $region7: #{h_swish.1} parent=0 // pred_check_branch
    %23 = sbr.rel (0) target = $region9
  $region8: #{h_swish.1} parent=0 // pred_region
    _
  $region9: #{h_swish.1} parent=0 // pred_fallthru
    _
  // Predicated region
  $region10: #{h_swish.1} parent=0 // pred_check
    _
  $region11: #{h_swish.1} parent=0 // pred_check_branch
    %25 = sbr.rel (0) target = $region13
  $region12: #{h_swish.1} parent=0 // pred_region
    _
  $region13: #{h_swish.1} parent=0 // pred_fallthru
    _

</llo_original>
